<compile_context>
chip_gen: v7x
topology: tpu7x:2x2x1
jax: 0.10.0
libtpu: 0.0.40
codegen_flags: <defaults>
</compile_context>

<pallas_src>
from functools import partial

import jax
import jax.numpy as jnp
from jax.experimental import pallas as pl
from jax.experimental.pallas import tpu as pltpu


_SMOOTH_TAPS = (0.0024, 0.0763, 0.8426, 0.0763, 0.0024)


def _inclusive_cumsum_lastdim(x):
    """Exact inclusive prefix-sum along the last axis (Hillis-Steele scan)."""
    c = x.shape[-1]
    s = 1
    while s < c:
        pad = jnp.zeros(x.shape[:-1] + (s,), x.dtype)
        x = x + jnp.concatenate([pad, x[..., : c - s]], axis=-1)
        s *= 2
    return x


def _frame_edm_kernel(idx_ref, x_ref, out_ref, acc_ref, *, total_rows, smooth):
    i = pl.program_id(0)

    @pl.when(i == 0)
    def _init():
        acc_ref[0, 0] = jnp.float32(0.0)

    x = x_ref[...].astype(jnp.float32)           # (TB, C) predicted distribution
    idx = idx_ref[...]                           # (TB, 1) int32 target bin

    tb, c = x.shape
    col = jax.lax.broadcasted_iota(jnp.int32, (tb, c), 1)

    if smooth:
        # 5-tap smoothing window centred on the target bin, truncated at the
        # edges and renormalised — matches smoothLabel()/smoothLabel3().
        dist = jnp.zeros((tb, c), jnp.float32)
        for d, w in zip(range(-2, 3), _SMOOTH_TAPS):
            dist = dist + jnp.where(col == idx + d, jnp.float32(w), 0.0)
        dist = dist / jnp.sum(dist, axis=-1, keepdims=True)
    else:
        dist = (col == idx).astype(jnp.float32)

    cdf_diff = _inclusive_cumsum_lastdim(x - dist)                 # (TB, C)
    mse = jnp.sum(cdf_diff * cdf_diff, axis=-1, keepdims=True) * (1.0 / c)
    emd = jnp.sqrt(mse + 1e-6)                                     # (TB, 1)

    # Mask rows of a possibly-partial last tile (select, so OOB garbage/NaN
    # never propagates).
    row = jax.lax.broadcasted_iota(jnp.int32, (tb, 1), 0) + i * tb
    emd = jnp.where(row < total_rows, emd, 0.0)

    acc_ref[0, 0] = acc_ref[0, 0] + jnp.sum(emd)
    out_ref[0, 0] = acc_ref[0, 0] / total_rows


def frame_edm_loss(inp, target, *, step=0.2, smooth=False, enable=True,
                   block_rows=2048):
    """Pallas equivalent of FrameEDMLoss(smooth, enable, step)(inp, target).

    inp:    (N, L, C) per-frame score distribution, C == int(4/step)
    target: (N, L, 1) or (N, L) float MOS scores in [1, 5)
    """
    if not enable:
        return jnp.float32(0.0)
    if inp.ndim == 2:
        # TODO(synk): 2-D `input` path (floatTensorToOnehot applied to the
        # prediction itself) not implemented; documented usage is (N, L, C).
        raise NotImplementedError("2-D input path of FrameEDMLoss not implemented")

    num_bins = int(4 / step)
    step100 = int(step * 100)
    n, l, c = inp.shape
    assert c == num_bins, (c, num_bins)
    b = n * l

    x = jnp.reshape(inp, (b, c))                      # native dtype; cast in-kernel
    t = jnp.reshape(target, (b,)).astype(jnp.float32)
    # floatTensorToOnehot bin index — computed once here (trivial fused XLA op)
    t_i = (t * 100.0 - 100.0).astype(jnp.int32)
    t_i = jnp.clip(t_i, 0, 399) // step100
    idx = jnp.reshape(t_i, (b, 1)).astype(jnp.int32)

    # Tile rows: either the full array (small b) or 2048-row tiles (pipelined,
    # VMEM-bounded on all of v5e/v6e/v7x). Partial last tile is masked in-kernel.
    tb = min(block_rows, b)
    grid = (pl.cdiv(b, tb),)

    out = pl.pallas_call(
        partial(_frame_edm_kernel, total_rows=b, smooth=smooth),
        out_shape=jax.ShapeDtypeStruct((1, 1), jnp.float32),
        grid=grid,
        in_specs=[
            pl.BlockSpec((tb, 1), lambda i: (i, 0)),   # target bin index (int32)
            pl.BlockSpec((tb, c), lambda i: (i, 0)),   # score distribution
        ],
        out_specs=pl.BlockSpec(memory_space=pltpu.SMEM),
        scratch_shapes=[pltpu.SMEM((1, 1), jnp.float32)],
        compiler_params=pltpu.CompilerParams(
            dimension_semantics=("arbitrary",)),
    )(idx, x)
    return out[0, 0]


def _reference(inp, target, *, step, smooth):
    """Pure-JAX mirror of the PyTorch FrameEDMLoss forward (3-D input path)."""
    num_bins = int(4 / step)
    step100 = int(step * 100)
    n, l, c = inp.shape
    b = n * l
    x = jnp.reshape(inp, (b, c)).astype(jnp.float32)
    t = jnp.reshape(target, (b,)).astype(jnp.float32)
    t_i = jnp.clip((t * 100.0 - 100.0).astype(jnp.int32), 0, 399) // step100

    if smooth:
        rows = jnp.arange(b)
        big = jnp.zeros((b, c + 4), jnp.float32)
        for d, w in enumerate(_SMOOTH_TAPS):
            big = big.at[rows, t_i + d].set(w)
        sl = big[:, 2:c + 2]
        tgt = sl / jnp.sum(sl, axis=-1, keepdims=True)
    else:
        tgt = jax.nn.one_hot(t_i, c, dtype=jnp.float32)

    cdf_diff = jnp.cumsum(x, axis=-1) - jnp.cumsum(tgt, axis=-1)
    emd = jnp.sqrt(jnp.mean(cdf_diff * cdf_diff, axis=-1) + 1e-6)
    return jnp.mean(emd)


if __name__ == "__main__":
    step = 0.2                       # -> C = 20 bins (matches smoothLabel's [:, 2:22])
    n, l = 2, 8
    c = int(4 / step)

    key = jax.random.PRNGKey(0)
    k1, k2 = jax.random.split(key)
    logits = jax.random.normal(k1, (n, l, c), dtype=jnp.float32)
    inp = jax.nn.softmax(logits, axis=-1).astype(jnp.bfloat16)   # native non-f32 dtype
    target = 1.0 + 3.9 * jax.random.uniform(k2, (n, l, 1), dtype=jnp.float32)

    for smooth in (False, True):
        loss = frame_edm_loss(inp, target, step=step, smooth=smooth)
        loss = jax.block_until_ready(loss)
        ref = _reference(inp, target, step=step, smooth=smooth)
        assert jnp.allclose(loss, ref, atol=1e-5, rtol=1e-5), (smooth, loss, ref)

    # enable=False path returns 0 (matches the module)
    assert frame_edm_loss(inp, target, step=step, smooth=False, enable=False) == 0.0

    print("KERNEL_OK")
</pallas_src>

<mosaic_0001>
module attributes {stable_mosaic.version = 11 : i64} {
  func.func @_frame_edm_kernel(%arg0: i32, %arg1: memref<16x1xi32, #tpu.memory_space<vmem>>, %arg2: memref<16x20xbf16, #tpu.memory_space<vmem>>, %arg3: memref<1x1xf32, #tpu.memory_space<smem>>, %arg4: memref<1x1xf32, #tpu.memory_space<smem>>) attributes {dimension_semantics = [#tpu.dimension_semantics<arbitrary>], iteration_bounds = array<i64: 1>, scalar_prefetch = 0 : i64, scratch_operands = 1 : i64, tpu.core_type = #tpu.core_type<tc>, window_params = [{transform_indices = @transform_0, window_bounds = array<i64: 16, 1>}, {transform_indices = @transform_1, window_bounds = array<i64: 16, 20>}, {transform_indices = @transform_2, window_bounds = array<i64: 1, 1>}]} {
    %c0_i32 = arith.constant 0 : i32
    %0 = arith.cmpi eq, %arg0, %c0_i32 : i32
    %1 = arith.extui %0 : i1 to i32
    %c0_i32_0 = arith.constant 0 : i32
    %2 = arith.cmpi ne, %1, %c0_i32_0 : i32
    scf.if %2 {
      %cst_23 = arith.constant 0.000000e+00 : f32
      %c0_24 = arith.constant 0 : index
      %c0_25 = arith.constant 0 : index
      %58 = memref.load %arg4[%c0_24, %c0_25] : memref<1x1xf32, #tpu.memory_space<smem>>
      memref.store %cst_23, %arg4[%c0_24, %c0_25] : memref<1x1xf32, #tpu.memory_space<smem>>
    } else {
    }
    %c0 = arith.constant 0 : index
    %c0_1 = arith.constant 0 : index
    %3 = vector.load %arg2[%c0, %c0_1] : memref<16x20xbf16, #tpu.memory_space<vmem>>, vector<16x20xbf16>
    %4 = arith.extf %3 : vector<16x20xbf16> to vector<16x20xf32>
    %c0_2 = arith.constant 0 : index
    %c0_3 = arith.constant 0 : index
    %5 = vector.load %arg1[%c0_2, %c0_3] : memref<16x1xi32, #tpu.memory_space<vmem>>, vector<16x1xi32>
    %6 = tpu.iota {dimensions = array<i32: 1>} : vector<16x20xi32>
    %7 = vector.broadcast %5 : vector<16x1xi32> to vector<16x20xi32>
    %8 = arith.cmpi eq, %6, %7 : vector<16x20xi32>
    %9 = arith.extui %8 : vector<16x20xi1> to vector<16x20xi32>
    %10 = arith.sitofp %9 : vector<16x20xi32> to vector<16x20xf32>
    %11 = arith.subf %4, %10 : vector<16x20xf32>
    %cst = arith.constant 0.000000e+00 : f32
    %12 = vector.broadcast %cst : f32 to vector<16x1xf32>
    %13 = vector.extract_strided_slice %11 {offsets = [0, 0], sizes = [16, 19], strides = [1, 1]} : vector<16x20xf32> to vector<16x19xf32>
    %14 = tpu.concatenate %12, %13 in 1 : vector<16x1xf32>, vector<16x19xf32> -> vector<16x20xf32>
    %15 = arith.addf %11, %14 : vector<16x20xf32>
    %cst_4 = arith.constant 0.000000e+00 : f32
    %16 = vector.broadcast %cst_4 : f32 to vector<16x2xf32>
    %17 = vector.extract_strided_slice %15 {offsets = [0, 0], sizes = [16, 18], strides = [1, 1]} : vector<16x20xf32> to vector<16x18xf32>
    %18 = tpu.concatenate %16, %17 in 1 : vector<16x2xf32>, vector<16x18xf32> -> vector<16x20xf32>
    %19 = arith.addf %15, %18 : vector<16x20xf32>
    %cst_5 = arith.constant 0.000000e+00 : f32
    %20 = vector.broadcast %cst_5 : f32 to vector<16x4xf32>
    %21 = vector.extract_strided_slice %19 {offsets = [0, 0], sizes = [16, 16], strides = [1, 1]} : vector<16x20xf32> to vector<16x16xf32>
    %22 = tpu.concatenate %20, %21 in 1 : vector<16x4xf32>, vector<16x16xf32> -> vector<16x20xf32>
    %23 = arith.addf %19, %22 : vector<16x20xf32>
    %cst_6 = arith.constant 0.000000e+00 : f32
    %24 = vector.broadcast %cst_6 : f32 to vector<16x8xf32>
    %25 = vector.extract_strided_slice %23 {offsets = [0, 0], sizes = [16, 12], strides = [1, 1]} : vector<16x20xf32> to vector<16x12xf32>
    %26 = tpu.concatenate %24, %25 in 1 : vector<16x8xf32>, vector<16x12xf32> -> vector<16x20xf32>
    %27 = arith.addf %23, %26 : vector<16x20xf32>
    %cst_7 = arith.constant 0.000000e+00 : f32
    %28 = vector.broadcast %cst_7 : f32 to vector<16x16xf32>
    %29 = vector.extract_strided_slice %27 {offsets = [0, 0], sizes = [16, 4], strides = [1, 1]} : vector<16x20xf32> to vector<16x4xf32>
    %30 = tpu.concatenate %28, %29 in 1 : vector<16x16xf32>, vector<16x4xf32> -> vector<16x20xf32>
    %31 = arith.addf %27, %30 : vector<16x20xf32>
    %32 = arith.mulf %31, %31 : vector<16x20xf32>
    %cst_8 = arith.constant dense<0.000000e+00> : vector<16xf32>
    %33 = vector.multi_reduction <add>, %32, %cst_8 [1] : vector<16x20xf32> to vector<16xf32>
    %34 = vector.shape_cast %33 : vector<16xf32> to vector<16x1xf32>
    %cst_9 = arith.constant 5.000000e-02 : f32
    %35 = vector.broadcast %cst_9 : f32 to vector<16x1xf32>
    %36 = arith.mulf %34, %35 : vector<16x1xf32>
    %cst_10 = arith.constant 9.99999997E-7 : f32
    %37 = vector.broadcast %cst_10 : f32 to vector<16x1xf32>
    %38 = arith.addf %36, %37 : vector<16x1xf32>
    %39 = math.sqrt %38 : vector<16x1xf32>
    %40 = tpu.iota {dimensions = array<i32: 0>} : vector<16x1xi32>
    %c16_i32 = arith.constant 16 : i32
    %41 = arith.muli %arg0, %c16_i32 : i32
    %42 = vector.broadcast %41 : i32 to vector<16x1xi32>
    %43 = arith.addi %40, %42 : vector<16x1xi32>
    %c16_i32_11 = arith.constant 16 : i32
    %44 = vector.broadcast %c16_i32_11 : i32 to vector<16x1xi32>
    %45 = arith.cmpi slt, %43, %44 : vector<16x1xi32>
    %cst_12 = arith.constant 0.000000e+00 : f32
    %46 = vector.broadcast %cst_12 : f32 to vector<16x1xf32>
    %47 = arith.select %45, %39, %46 : vector<16x1xi1>, vector<16x1xf32>
    %c0_13 = arith.constant 0 : index
    %c0_14 = arith.constant 0 : index
    %48 = memref.load %arg4[%c0_13, %c0_14] : memref<1x1xf32, #tpu.memory_space<smem>>
    %49 = vector.shape_cast %47 : vector<16x1xf32> to vector<1x16x1xf32>
    %cst_15 = arith.constant dense<0.000000e+00> : vector<1xf32>
    %50 = vector.multi_reduction <add>, %49, %cst_15 [1, 2] : vector<1x16x1xf32> to vector<1xf32>
    %51 = vector.shape_cast %50 : vector<1xf32> to vector<1x1x1xf32>
    %52 = vector.extract %51[0, 0, 0] : f32 from vector<1x1x1xf32>
    %53 = arith.addf %48, %52 : f32
    %c0_16 = arith.constant 0 : index
    %c0_17 = arith.constant 0 : index
    %54 = memref.load %arg4[%c0_16, %c0_17] : memref<1x1xf32, #tpu.memory_space<smem>>
    memref.store %53, %arg4[%c0_16, %c0_17] : memref<1x1xf32, #tpu.memory_space<smem>>
    %c0_18 = arith.constant 0 : index
    %c0_19 = arith.constant 0 : index
    %55 = memref.load %arg4[%c0_18, %c0_19] : memref<1x1xf32, #tpu.memory_space<smem>>
    %cst_20 = arith.constant 1.600000e+01 : f32
    %56 = arith.divf %55, %cst_20 : f32
    %c0_21 = arith.constant 0 : index
    %c0_22 = arith.constant 0 : index
    %57 = memref.load %arg3[%c0_21, %c0_22] : memref<1x1xf32, #tpu.memory_space<smem>>
    memref.store %56, %arg3[%c0_21, %c0_22] : memref<1x1xf32, #tpu.memory_space<smem>>
    return
  }
  func.func @transform_0(%arg0: i32) -> (i32, i32) {
    %c0_i32 = arith.constant 0 : i32
    %c0_i32_0 = arith.constant 0 : i32
    return %arg0, %c0_i32 : i32, i32
  }
  func.func @transform_1(%arg0: i32) -> (i32, i32) {
    %c0_i32 = arith.constant 0 : i32
    %c0_i32_0 = arith.constant 0 : i32
    return %arg0, %c0_i32 : i32, i32
  }
  func.func @transform_2(%arg0: i32) -> (i32, i32) {
    %c0_i32 = arith.constant 0 : i32
    %c0_i32_0 = arith.constant 0 : i32
    %c0_i32_1 = arith.constant 0 : i32
    return %c0_i32, %c0_i32_0 : i32, i32
  }
}

</mosaic_0001>

<llo_original>
// kernel: tpu_custom_call.1
$region0: #{tpu_custom_call.1}
  #allocation0 [shape = 'u32[]', space=smem, size = 0x4, offset = 0x4, fixed_abs, tag = 'smem constant byte address 0x4 - core index']
  #allocation1 [shape = 'u32[144,128]{1,0:T(1,128)}', space=vmem, size = 0x12000, scoped, tag = 'internal scratch']
  #allocation2 [shape = 'f32[1,1]{1,0:T(1,128)}', space=smem, size = 0x200, scoped, tag = 'scratch operand']
  %s0 = inlined_call_operand.vmem [shape: s32[16,1], index: 0, kind: input, shape index: {}]
  %s1 = inlined_call_operand.vmem [shape: bf16[16,20], index: 1, kind: input, shape index: {}]
  %s2 = inlined_call_operand.hbm [shape: f32[1,1], index: 2, kind: output, shape index: {}]
  %s3 = sld [smem:[#allocation0]]
  $region22: #{tpu_custom_call.1} parent=0
    _
  %s5 = ssub.s32 1, %s3
  %s6 = scalar_select 0, %s5, %s3
  $region1: #{tpu_custom_call.1} parent=0
    #allocation3 [shape = 'u8[512]{0}', space=smem, size = 0x200, scoped, tag = 'output window, operand 0, single buffered']
    #allocation4 [shape = 's32[1]{0}', space=sflag, size = 0x4, scoped, tag = 'scoped memory for tpu_custom_call.1']
    %7 = vsyncpa [#allocation4], 0
    // Predicated region
    $region2: #{tpu_custom_call.1} parent=1 // pred_check
      _
    $region3: #{tpu_custom_call.1} parent=1 // pred_check_branch
      %9 = sbr.rel (0) target = $region5
    $region4: #{tpu_custom_call.1} parent=1 // pred_region
      _
    $region5: #{tpu_custom_call.1} parent=1 // pred_fallthru
      _
    // Predicated region
    $region6: #{tpu_custom_call.1} parent=1 // pred_check
      _
    $region7: #{tpu_custom_call.1} parent=1 // pred_check_branch
      %11 = sbr.rel (0) target = $region9
    $region8: #{tpu_custom_call.1} parent=1 // pred_region
      _
    $region9: #{tpu_custom_call.1} parent=1 // pred_fallthru
      _
    %p12 = scmp.eq.s32.totalorder 0, 0
    // Predicated region
    $region10: #{tpu_custom_call.1} parent=1 // pred_check
      %p13 = pneg %p12
    $region11: #{tpu_custom_call.1} parent=1 // pred_check_branch
      %15 = sbr.rel (%p13) target = $region13
    $region12: #{tpu_custom_call.1} parent=1 // pred_region
      %s16 = scalar_lea.smem [#allocation2], 0
      %17 = sst [smem:[%s16]] 0.0
    $region13: #{tpu_custom_call.1} parent=1 // pred_fallthru
      _
    %v18 = vld [vmem:[%s1] sm:$0xf]
    %v19 = vld [vmem:[%s1 + $0x4] sm:$0xf]
    %v20 = vunpack.c.l.bf16 %v18
    %v21 = vunpack.c.l.bf16 %v19
    %v22 = vld [vmem:[%s0] sm:$0xff]
    %v23 = vld [vmem:[%s0 + $0x8] sm:$0xff]
    %v24 = vlaneseq
    %v25 = vand.u32 %v24, 127
    %26 = vset.pattern.permute.xlu0 0
    %27 = vperm.xlu0 %26, %v22
    %v28 = vpop.permute.xlu0 %27
    %29 = vset.pattern.permute.xlu0 0
    %30 = vperm.xlu0 %29, %v23
    %v31 = vpop.permute.xlu0 %30
    %vm32 = vcmp.eq.s32.totalorder %v25, %v28
    %vm33 = vcmp.eq.s32.totalorder %v25, %v31
    %v34 = vsel %vm32, 1, 0
    %v35 = vsel %vm33, 1, 0
    %v36 = vcvt.s32.f32 %v34
    %v37 = vcvt.s32.f32 %v35
    %v38 = vsub.f32 %v20, %v36
    %v39 = vsub.f32 %v21, %v37
    %42 = vrot.lane.b32.xlu0 %v38, 1
    %v43 = vpop.permute.xlu0 %42
    %44 = vrot.lane.b32.xlu0 %v39, 1
    %v45 = vpop.permute.xlu0 %44
    %vm48 = vcmask 7168
    %v49 = vsel %vm48, 0.0, %v43
    %v50 = vsel %vm48, 0.0, %v45
    %v51 = vadd.f32 %v38, %v49
    %v52 = vadd.f32 %v39, %v50
    %55 = vrot.lane.b32.xlu0 %v51, 2
    %v56 = vpop.permute.xlu0 %55
    %57 = vrot.lane.b32.xlu0 %v52, 2
    %v58 = vpop.permute.xlu0 %57
    %vm61 = vcmask 15360
    %v62 = vsel %vm61, 0.0, %v56
    %v63 = vsel %vm61, 0.0, %v58
    %v64 = vadd.f32 %v51, %v62
    %v65 = vadd.f32 %v52, %v63
    %68 = vrot.lane.b32.xlu0 %v64, 4
    %v69 = vpop.permute.xlu0 %68
    %70 = vrot.lane.b32.xlu0 %v65, 4
    %v71 = vpop.permute.xlu0 %70
    %vm74 = vcmask 31744
    %v75 = vsel %vm74, 0.0, %v69
    %v76 = vsel %vm74, 0.0, %v71
    %v77 = vadd.f32 %v64, %v75
    %v78 = vadd.f32 %v65, %v76
    %81 = vrot.lane.b32.xlu0 %v77, 8
    %v82 = vpop.permute.xlu0 %81
    %83 = vrot.lane.b32.xlu0 %v78, 8
    %v84 = vpop.permute.xlu0 %83
    %vm87 = vcmask 64512
    %v88 = vsel %vm87, 0.0, %v82
    %v89 = vsel %vm87, 0.0, %v84
    %v90 = vadd.f32 %v77, %v88
    %v91 = vadd.f32 %v78, %v89
    %94 = vrot.lane.b32.xlu0 %v90, 16
    %v95 = vpop.permute.xlu0 %94
    %96 = vrot.lane.b32.xlu0 %v91, 16
    %v97 = vpop.permute.xlu0 %96
    %vm100 = vcmask 130048
    %v101 = vsel %vm100, 0.0, %v95
    %v102 = vsel %vm100, 0.0, %v97
    %v103 = vadd.f32 %v90, %v101
    %v104 = vadd.f32 %v91, %v102
    %v105 = vmul.f32 %v103, %v103
    %v106 = vmul.f32 %v104, %v104
    %vm107 = vcmask 162816
    %v108 = vsel %vm107, %v105, 0.0
    %109 = vadd.xlane.f32.xlu0 %v108
    %v110 = vpop.xlane.xlu0 %109
    %v111 = vsel %vm107, %v106, 0.0
    %112 = vadd.xlane.f32.xlu0 %v111
    %v113 = vpop.xlane.xlu0 %112
    %v114 = vmul.f32 %v110, 0.05
    %v115 = vmul.f32 %v113, 0.05
    %v116 = vadd.f32 %v114, 1e-06
    %v117 = vadd.f32 %v115, 1e-06
    %v118 = vrsqrt.pop %v116
    %v119 = vmul.f32 %v116, %v118
    %vm120 = vcmp.eq.f32.partialorder %v116, inf
    %v121 = vsel %vm120, %v116, %v119
    %vm122 = vcmp.eq.f32.partialorder %v116, 0.0
    %v123 = vand.u32 %v116, 2147483648
    %v124 = vsel %vm122, %v123, %v121
    %v125 = vrsqrt.pop %v117
    %v126 = vmul.f32 %v117, %v125
    %vm127 = vcmp.eq.f32.partialorder %v117, inf
    %v128 = vsel %vm127, %v117, %v126
    %vm129 = vcmp.eq.f32.partialorder %v117, 0.0
    %v130 = vand.u32 %v117, 2147483648
    %v131 = vsel %vm129, %v130, %v128
    %v132 = vlaneseq
    %v133 = vshrl.u32 %v132, 7
    %v134 = vadd.s32 %v133, 8
    %s135 = smul.u32 0, 16
    %v136 = vstv %s135
    %v137 = vadd.s32 %v133, %v136
    %v138 = vadd.s32 %v134, %v136
    %vm139 = vcmp.lt.s32.totalorder %v137, 16
    %vm140 = vcmp.lt.s32.totalorder %v138, 16
    %v141 = vsel %vm139, %v124, 0.0
    %v142 = vsel %vm140, %v131, 0.0
    %s143 = sld [smem:[#allocation2]]
    %v144 = vsel %vm48, %v141, 0.0
    %v145 = vsel %vm48, %v142, 0.0
    %v146 = vadd.f32 %v144, %v145
    %147 = vadd.xlane.f32.xlu0 %v146
    %v148 = vpop.xlane.xlu0 %147
    %v149 = vrot.slane %v148, 4
    %v150 = vadd.f32 %v148, %v149
    %v151 = vrot.slane %v150, 2
    %v152 = vadd.f32 %v150, %v151
    %v153 = vrot.slane %v152, 1
    %v154 = vadd.f32 %v152, %v153
    %s155 = vtos %v154
    %s156 = sadd.f32 %s143, %s155
    %s157 = scalar_lea.smem [#allocation2], 0
    %158 = sst [smem:[%s157]] %s156
    %s159 = sld [smem:[#allocation2]]
    %v160 = vrcp.pop 16.0
    %s161 = vtos %v160
    %s162 = smul.f32 %s159, %s161
    %s163 = scalar_lea.smem [#allocation3], 0
    %164 = sst [smem:[%s163]] %s162
    // Predicated region
    $region14: #{tpu_custom_call.1} parent=1 // pred_check
      _
    $region15: #{tpu_custom_call.1} parent=1 // pred_check_branch
      %166 = sbr.rel (0) target = $region17
    $region16: #{tpu_custom_call.1} parent=1 // pred_region
      %s168 = ssub.s32 16, 16
      %169 = vsyncadd [#allocation4], %s168
      %172 = dma.smem_to_hbm [#allocation3], 16, %s2, [#allocation4]
    $region17: #{tpu_custom_call.1} parent=1 // pred_fallthru
      _
    // Predicated region
    $region18: #{tpu_custom_call.1} parent=1 // pred_check
      _
    $region19: #{tpu_custom_call.1} parent=1 // pred_check_branch
      %174 = sbr.rel (0) target = $region21
    $region20: #{tpu_custom_call.1} parent=1 // pred_region
      %175 = dma.done [#allocation4], 16
    $region21: #{tpu_custom_call.1} parent=1 // pred_fallthru
      _
    %176 = sfence
    %177 = vsyncpa [#allocation4], 1

</llo_original>
